<compile_context>
chip_gen: v5e
topology: v5e:2x2
jax: 0.10.0
libtpu: 0.0.40
codegen_flags: <defaults>
</compile_context>

<pallas_src>
import functools

import jax
import jax.numpy as jnp
import numpy as np
from jax.experimental import pallas as pl
from jax.experimental.pallas import tpu as pltpu


def _attn_weights_kernel(q_ref, k_ref, wqt_ref, bq_ref, wkt_ref, bk_ref, out_ref,
                         *, num_heads, head_dim, batch, q_len, k_len):
    """Whole-batch attention-weights kernel (single grid step).

    q_ref  : (batch*q_len, H)   batch-major rows (b, t)
    k_ref  : (batch*k_len, H)   batch-major rows (b, s)
    wqt/wkt: (H, H) pre-transposed so the projection is x @ W
    bq/bk  : (1, H)
    out    : (batch, q_len, LK_PAD), LK_PAD a multiple of 128 (lane-dense)
    """
    inv_scale = 1.0 / float(head_dim) ** 0.5
    inv_heads = 1.0 / float(num_heads)

    # ---- projections: one MXU matmul over ALL rows of each input ------------
    # Weights come from HBM exactly once per call; 1/sqrt(head_dim) is folded
    # into Q so the energies need no extra scaling pass.
    Qp = (jnp.dot(q_ref[...], wqt_ref[...], preferred_element_type=jnp.float32)
          + bq_ref[...]) * inv_scale                                  # (B*Lq, H)
    Kp = (jnp.dot(k_ref[...], wkt_ref[...], preferred_element_type=jnp.float32)
          + bk_ref[...])                                              # (B*Lk, H)

    # ---- batch views: rows are already batch-major, so per-batch views are --
    # ---- plain contiguous row-block slices (no scratch, no masked stores) ---
    Q3 = jnp.stack([Qp[b * q_len:(b + 1) * q_len] for b in range(batch)], axis=0)  # (B, Lq, H)
    K3 = jnp.stack([Kp[b * k_len:(b + 1) * k_len] for b in range(batch)], axis=0)  # (B, Lk, H)

    # ---- per-head energies (batched over batch, contraction on the native ---
    # ---- last dim), stacked on the leading axis so the softmax below runs ---
    # ---- ONCE for all heads and batch elements ------------------------------
    e = jnp.concatenate([
        jnp.einsum('bqd,bkd->bqk',
                   Q3[:, :, h * head_dim:(h + 1) * head_dim],
                   K3[:, :, h * head_dim:(h + 1) * head_dim],
                   preferred_element_type=jnp.float32)
        for h in range(num_heads)], axis=0)                           # (heads*B, Lq, Lk)

    # ---- stable softmax over keys, vectorized across heads and batch --------
    e = e - jnp.max(e, axis=-1, keepdims=True)
    p = jnp.exp(e)
    p = p * pl.reciprocal(jnp.sum(p, axis=-1, keepdims=True), approx=False)

    # ---- mean over heads: head h occupies leading rows [h*B, (h+1)*B) -------
    attn = p[0:batch]
    for h in range(1, num_heads):
        attn = attn + p[h * batch:(h + 1) * batch]
    attn = attn * inv_heads                                           # (B, Lq, Lk)

    # ---- single-store epilogue into the lane-dense output block -------------
    # Lanes >= k_len are never read (the wrapper slices them away), so they are
    # left untouched instead of being zero-filled with a second store pass.
    out_ref[:, :, 0:k_len] = attn


def prepare_params(params):
    """One-time parameter preparation (OUTSIDE the per-call hot path):
    pre-transpose the Linear weights to (in, out) and reshape biases to (1, H)
    so no per-call HBM weight transpose is needed."""
    H = params["wq"].shape[0]
    return {
        "wq_t": jnp.transpose(jnp.asarray(params["wq"], jnp.float32)),
        "wk_t": jnp.transpose(jnp.asarray(params["wk"], jnp.float32)),
        "bq": jnp.asarray(params["bq"], jnp.float32).reshape(1, H),
        "bk": jnp.asarray(params["bk"], jnp.float32).reshape(1, H),
    }


@functools.partial(jax.jit, static_argnames=("num_heads",))
def attention_forward(hidden, encoder_outputs, prepared, *, num_heads=4):
    """JAX/Pallas equivalent of Attention.forward.

    hidden:          [q_len, batch, hidden]
    encoder_outputs: [k_len, batch, hidden]
    prepared:        output of prepare_params()
    returns attn_weights: [batch, q_len, k_len] (dim 0 dropped if batch == 1,
    matching torch's .squeeze(0)).
    """
    Lq, B, H = hidden.shape
    Lk = encoder_outputs.shape[0]
    assert H % num_heads == 0
    head_dim = H // num_heads
    lk_pad = ((Lk + 127) // 128) * 128                    # lane-dense out width

    # time-major -> batch-major in the wrapper (tiny XLA copy, free next to the
    # weight DMA); the kernel then only does contiguous row-block slicing.
    q2d = jnp.transpose(hidden, (1, 0, 2)).reshape(B * Lq, H)
    k2d = jnp.transpose(encoder_outputs, (1, 0, 2)).reshape(B * Lk, H)

    kernel = functools.partial(_attn_weights_kernel,
                               num_heads=num_heads, head_dim=head_dim,
                               batch=B, q_len=Lq, k_len=Lk)

    # VMEM footprint here is ~1.2 MiB (fits every generation's scoped default);
    # for much larger H/Lk, add an Lk grid axis and set vmem_limit_bytes.
    out = pl.pallas_call(
        kernel,
        out_shape=jax.ShapeDtypeStruct((B, Lq, lk_pad), jnp.float32),
        grid_spec=pltpu.PrefetchScalarGridSpec(
            num_scalar_prefetch=0,
            grid=(1,),                                    # whole batch per step:
                                                          # weight DMA amortized
                                                          # over every query row
            in_specs=[
                pl.BlockSpec((B * Lq, H), lambda i: (0, 0)),   # batch-major query
                pl.BlockSpec((B * Lk, H), lambda i: (0, 0)),   # batch-major keys
                pl.BlockSpec((H, H), lambda i: (0, 0)),        # Wq (pre-transposed)
                pl.BlockSpec((1, H), lambda i: (0, 0)),        # bq
                pl.BlockSpec((H, H), lambda i: (0, 0)),        # Wk (pre-transposed)
                pl.BlockSpec((1, H), lambda i: (0, 0)),        # bk
            ],
            out_specs=pl.BlockSpec((B, Lq, lk_pad), lambda i: (0, 0, 0)),
        ),
        compiler_params=pltpu.CompilerParams(
            dimension_semantics=("arbitrary",)),
    )(q2d, k2d, prepared["wq_t"], prepared["bq"], prepared["wk_t"], prepared["bk"])
    # TODO(synk): inside an autoregressive decode loop, prefetch wq_t/wk_t for
    # the next step with a cross-pallas_call DMA future (P10) and/or batch
    # several decoder timesteps per launch; for large batches on v7x, shard a
    # "parallel" grid axis over B so both TensorCores are used.

    attn = out[:, :, :Lk]                                 # drop lane padding
    if B == 1:                                            # torch .squeeze(0)
        attn = attn[0]
    return attn


def _reference(hidden, encoder_outputs, params, *, num_heads=4):
    """Pure-JAX reference matching the PyTorch module (eval mode)."""
    query = jnp.transpose(hidden, (1, 0, 2))
    key = jnp.transpose(encoder_outputs, (1, 0, 2))
    B, Lq, H = query.shape
    Lk = key.shape[1]
    hd = H // num_heads
    Q = query @ params["wq"].T + params["bq"]
    K = key @ params["wk"].T + params["bk"]
    Q = Q.reshape(B, Lq, num_heads, hd).transpose(0, 2, 1, 3)
    K = K.reshape(B, Lk, num_heads, hd).transpose(0, 2, 1, 3)
    energy = jnp.einsum("bhqd,bhkd->bhqk", Q, K) / jnp.sqrt(jnp.float32(hd))
    attn = jax.nn.softmax(energy, axis=-1)
    attn = attn.mean(axis=1)
    if attn.shape[0] == 1:
        attn = attn[0]
    return attn


def init_params(key, hidden_size):
    """Deterministic synthetic init (PyTorch nn.Linear-style uniform)."""
    ks = jax.random.split(key, 4)
    bound = 1.0 / np.sqrt(hidden_size)
    u = lambda k, shape: jax.random.uniform(k, shape, jnp.float32, -bound, bound)
    return {
        "wq": u(ks[0], (hidden_size, hidden_size)),   # torch Linear weight [out, in]
        "bq": u(ks[1], (hidden_size,)),
        "wk": u(ks[2], (hidden_size, hidden_size)),
        "bk": u(ks[3], (hidden_size,)),
    }
    # TODO(synk): dropout on attention weights is train-mode only; eval-mode
    # (identity) semantics are implemented here.


if __name__ == "__main__":
    hidden_size = 256     # matches the module's hidden_size; divisible by num_heads
    num_heads = 4
    batch = 2
    q_len = 1             # decoder hidden: [1, batch, hidden]
    k_len = 10            # encoder outputs: [src_len, batch, hidden]

    root = jax.random.PRNGKey(0)
    k_h, k_e, k_p = jax.random.split(root, 3)
    hidden = jax.random.normal(k_h, (q_len, batch, hidden_size), jnp.float32)
    encoder_outputs = jax.random.normal(k_e, (k_len, batch, hidden_size), jnp.float32)
    params = init_params(k_p, hidden_size)
    prepared = prepare_params(params)     # one-time: pre-transposed weights

    out = attention_forward(hidden, encoder_outputs, prepared, num_heads=num_heads)
    out = jax.block_until_ready(out)

    ref = _reference(hidden, encoder_outputs, params, num_heads=num_heads)
    np.testing.assert_allclose(np.asarray(out), np.asarray(ref), rtol=1e-4, atol=1e-5)

    print("KERNEL_OK")
</pallas_src>

<mosaic_0001>
module attributes {stable_mosaic.version = 11 : i64} {
  func.func @_attn_weights_kernel(%arg0: i32, %arg1: memref<2x256xf32, #tpu.memory_space<vmem>>, %arg2: memref<20x256xf32, #tpu.memory_space<vmem>>, %arg3: memref<256x256xf32, #tpu.memory_space<vmem>>, %arg4: memref<1x256xf32, #tpu.memory_space<vmem>>, %arg5: memref<256x256xf32, #tpu.memory_space<vmem>>, %arg6: memref<1x256xf32, #tpu.memory_space<vmem>>, %arg7: memref<2x1x128xf32, #tpu.memory_space<vmem>>) attributes {dimension_semantics = [#tpu.dimension_semantics<arbitrary>], iteration_bounds = array<i64: 1>, scalar_prefetch = 0 : i64, scratch_operands = 0 : i64, tpu.core_type = #tpu.core_type<tc>, window_params = [{pipeline_mode = #tpu.pipeline_mode<synchronous>, transform_indices = @transform_0, window_bounds = array<i64: 2, 256>}, {pipeline_mode = #tpu.pipeline_mode<synchronous>, transform_indices = @transform_1, window_bounds = array<i64: 20, 256>}, {pipeline_mode = #tpu.pipeline_mode<synchronous>, transform_indices = @transform_2, window_bounds = array<i64: 256, 256>}, {pipeline_mode = #tpu.pipeline_mode<synchronous>, transform_indices = @transform_3, window_bounds = array<i64: 1, 256>}, {pipeline_mode = #tpu.pipeline_mode<synchronous>, transform_indices = @transform_4, window_bounds = array<i64: 256, 256>}, {pipeline_mode = #tpu.pipeline_mode<synchronous>, transform_indices = @transform_5, window_bounds = array<i64: 1, 256>}, {pipeline_mode = #tpu.pipeline_mode<synchronous>, transform_indices = @transform_6, window_bounds = array<i64: 2, 1, 128>}]} {
    %c0 = arith.constant 0 : index
    %c0_0 = arith.constant 0 : index
    %0 = vector.load %arg1[%c0, %c0_0] : memref<2x256xf32, #tpu.memory_space<vmem>>, vector<2x256xf32>
    %c0_1 = arith.constant 0 : index
    %c0_2 = arith.constant 0 : index
    %1 = vector.load %arg3[%c0_1, %c0_2] : memref<256x256xf32, #tpu.memory_space<vmem>>, vector<256x256xf32>
    %cst = arith.constant dense<0.000000e+00> : vector<2x256xf32>
    %2 = tpu.matmul %0, %1, %cst {dimension_numbers = #tpu.dot_dimension_numbers<[1], [0], [0], [1], [0, 0, 1, 1], [], []>} : vector<2x256xf32>, vector<256x256xf32>, vector<2x256xf32> -> vector<2x256xf32>
    %c0_3 = arith.constant 0 : index
    %c0_4 = arith.constant 0 : index
    %3 = vector.load %arg4[%c0_3, %c0_4] : memref<1x256xf32, #tpu.memory_space<vmem>>, vector<1x256xf32>
    %4 = vector.broadcast %3 : vector<1x256xf32> to vector<2x256xf32>
    %5 = arith.addf %2, %4 : vector<2x256xf32>
    %cst_5 = arith.constant 1.250000e-01 : f32
    %6 = vector.broadcast %cst_5 : f32 to vector<2x256xf32>
    %7 = arith.mulf %5, %6 : vector<2x256xf32>
    %c0_6 = arith.constant 0 : index
    %c0_7 = arith.constant 0 : index
    %8 = vector.load %arg2[%c0_6, %c0_7] : memref<20x256xf32, #tpu.memory_space<vmem>>, vector<20x256xf32>
    %c0_8 = arith.constant 0 : index
    %c0_9 = arith.constant 0 : index
    %9 = vector.load %arg5[%c0_8, %c0_9] : memref<256x256xf32, #tpu.memory_space<vmem>>, vector<256x256xf32>
    %cst_10 = arith.constant dense<0.000000e+00> : vector<20x256xf32>
    %10 = tpu.matmul %8, %9, %cst_10 {dimension_numbers = #tpu.dot_dimension_numbers<[1], [0], [0], [1], [0, 0, 1, 1], [], []>} : vector<20x256xf32>, vector<256x256xf32>, vector<20x256xf32> -> vector<20x256xf32>
    %c0_11 = arith.constant 0 : index
    %c0_12 = arith.constant 0 : index
    %11 = vector.load %arg6[%c0_11, %c0_12] : memref<1x256xf32, #tpu.memory_space<vmem>>, vector<1x256xf32>
    %12 = vector.broadcast %11 : vector<1x256xf32> to vector<20x256xf32>
    %13 = arith.addf %10, %12 : vector<20x256xf32>
    %14 = vector.extract_strided_slice %7 {offsets = [0, 0], sizes = [1, 256], strides = [1, 1]} : vector<2x256xf32> to vector<1x256xf32>
    %15 = vector.extract_strided_slice %7 {offsets = [1, 0], sizes = [1, 256], strides = [1, 1]} : vector<2x256xf32> to vector<1x256xf32>
    %16 = vector.shape_cast %14 : vector<1x256xf32> to vector<1x1x256xf32>
    %17 = vector.shape_cast %15 : vector<1x256xf32> to vector<1x1x256xf32>
    %18 = tpu.concatenate %16, %17 in 0 : vector<1x1x256xf32>, vector<1x1x256xf32> -> vector<2x1x256xf32>
    %19 = vector.extract_strided_slice %13 {offsets = [0, 0], sizes = [10, 256], strides = [1, 1]} : vector<20x256xf32> to vector<10x256xf32>
    %20 = vector.extract_strided_slice %13 {offsets = [10, 0], sizes = [10, 256], strides = [1, 1]} : vector<20x256xf32> to vector<10x256xf32>
    %21 = vector.shape_cast %19 : vector<10x256xf32> to vector<1x10x256xf32>
    %22 = vector.shape_cast %20 : vector<10x256xf32> to vector<1x10x256xf32>
    %23 = tpu.concatenate %21, %22 in 0 : vector<1x10x256xf32>, vector<1x10x256xf32> -> vector<2x10x256xf32>
    %24 = vector.extract_strided_slice %18 {offsets = [0, 0, 0], sizes = [2, 1, 64], strides = [1, 1, 1]} : vector<2x1x256xf32> to vector<2x1x64xf32>
    %25 = vector.extract_strided_slice %23 {offsets = [0, 0, 0], sizes = [2, 10, 64], strides = [1, 1, 1]} : vector<2x10x256xf32> to vector<2x10x64xf32>
    "tpu.trace_start"() <{level = 10 : i32, message = "bqd,bkd->bqk"}> : () -> ()
    %cst_13 = arith.constant dense<0.000000e+00> : vector<2x1x10xf32>
    %26 = tpu.matmul %24, %25, %cst_13 {dimension_numbers = #tpu.dot_dimension_numbers<[2], [2], [1], [1], [0, 0, 0, 1, 1, 1], [0], [0]>} : vector<2x1x64xf32>, vector<2x10x64xf32>, vector<2x1x10xf32> -> vector<2x1x10xf32>
    "tpu.trace_stop"() : () -> ()
    %27 = vector.extract_strided_slice %18 {offsets = [0, 0, 64], sizes = [2, 1, 64], strides = [1, 1, 1]} : vector<2x1x256xf32> to vector<2x1x64xf32>
    %28 = vector.extract_strided_slice %23 {offsets = [0, 0, 64], sizes = [2, 10, 64], strides = [1, 1, 1]} : vector<2x10x256xf32> to vector<2x10x64xf32>
    "tpu.trace_start"() <{level = 10 : i32, message = "bqd,bkd->bqk"}> : () -> ()
    %cst_14 = arith.constant dense<0.000000e+00> : vector<2x1x10xf32>
    %29 = tpu.matmul %27, %28, %cst_14 {dimension_numbers = #tpu.dot_dimension_numbers<[2], [2], [1], [1], [0, 0, 0, 1, 1, 1], [0], [0]>} : vector<2x1x64xf32>, vector<2x10x64xf32>, vector<2x1x10xf32> -> vector<2x1x10xf32>
    "tpu.trace_stop"() : () -> ()
    %30 = vector.extract_strided_slice %18 {offsets = [0, 0, 128], sizes = [2, 1, 64], strides = [1, 1, 1]} : vector<2x1x256xf32> to vector<2x1x64xf32>
    %31 = vector.extract_strided_slice %23 {offsets = [0, 0, 128], sizes = [2, 10, 64], strides = [1, 1, 1]} : vector<2x10x256xf32> to vector<2x10x64xf32>
    "tpu.trace_start"() <{level = 10 : i32, message = "bqd,bkd->bqk"}> : () -> ()
    %cst_15 = arith.constant dense<0.000000e+00> : vector<2x1x10xf32>
    %32 = tpu.matmul %30, %31, %cst_15 {dimension_numbers = #tpu.dot_dimension_numbers<[2], [2], [1], [1], [0, 0, 0, 1, 1, 1], [0], [0]>} : vector<2x1x64xf32>, vector<2x10x64xf32>, vector<2x1x10xf32> -> vector<2x1x10xf32>
    "tpu.trace_stop"() : () -> ()
    %33 = vector.extract_strided_slice %18 {offsets = [0, 0, 192], sizes = [2, 1, 64], strides = [1, 1, 1]} : vector<2x1x256xf32> to vector<2x1x64xf32>
    %34 = vector.extract_strided_slice %23 {offsets = [0, 0, 192], sizes = [2, 10, 64], strides = [1, 1, 1]} : vector<2x10x256xf32> to vector<2x10x64xf32>
    "tpu.trace_start"() <{level = 10 : i32, message = "bqd,bkd->bqk"}> : () -> ()
    %cst_16 = arith.constant dense<0.000000e+00> : vector<2x1x10xf32>
    %35 = tpu.matmul %33, %34, %cst_16 {dimension_numbers = #tpu.dot_dimension_numbers<[2], [2], [1], [1], [0, 0, 0, 1, 1, 1], [0], [0]>} : vector<2x1x64xf32>, vector<2x10x64xf32>, vector<2x1x10xf32> -> vector<2x1x10xf32>
    "tpu.trace_stop"() : () -> ()
    %36 = tpu.concatenate %26, %29, %32, %35 in 0 : vector<2x1x10xf32>, vector<2x1x10xf32>, vector<2x1x10xf32>, vector<2x1x10xf32> -> vector<8x1x10xf32>
    %cst_17 = arith.constant dense<0xFF800000> : vector<8x1xf32>
    %37 = vector.multi_reduction <maximumf>, %36, %cst_17 [2] : vector<8x1x10xf32> to vector<8x1xf32>
    %38 = vector.shape_cast %37 : vector<8x1xf32> to vector<8x1x1xf32>
    %39 = vector.broadcast %38 : vector<8x1x1xf32> to vector<8x1x10xf32>
    %40 = arith.subf %36, %39 : vector<8x1x10xf32>
    %41 = math.exp %40 : vector<8x1x10xf32>
    %cst_18 = arith.constant dense<0.000000e+00> : vector<8x1xf32>
    %42 = vector.multi_reduction <add>, %41, %cst_18 [2] : vector<8x1x10xf32> to vector<8x1xf32>
    %43 = vector.shape_cast %42 : vector<8x1xf32> to vector<8x1x1xf32>
    %44 = tpu.reciprocal %43 : vector<8x1x1xf32> -> vector<8x1x1xf32>
    %45 = vector.broadcast %44 : vector<8x1x1xf32> to vector<8x1x10xf32>
    %46 = arith.mulf %41, %45 : vector<8x1x10xf32>
    %47 = vector.extract_strided_slice %46 {offsets = [0, 0, 0], sizes = [2, 1, 10], strides = [1, 1, 1]} : vector<8x1x10xf32> to vector<2x1x10xf32>
    %48 = vector.extract_strided_slice %46 {offsets = [2, 0, 0], sizes = [2, 1, 10], strides = [1, 1, 1]} : vector<8x1x10xf32> to vector<2x1x10xf32>
    %49 = arith.addf %47, %48 : vector<2x1x10xf32>
    %50 = vector.extract_strided_slice %46 {offsets = [4, 0, 0], sizes = [2, 1, 10], strides = [1, 1, 1]} : vector<8x1x10xf32> to vector<2x1x10xf32>
    %51 = arith.addf %49, %50 : vector<2x1x10xf32>
    %52 = vector.extract_strided_slice %46 {offsets = [6, 0, 0], sizes = [2, 1, 10], strides = [1, 1, 1]} : vector<8x1x10xf32> to vector<2x1x10xf32>
    %53 = arith.addf %51, %52 : vector<2x1x10xf32>
    %cst_19 = arith.constant 2.500000e-01 : f32
    %54 = vector.broadcast %cst_19 : f32 to vector<2x1x10xf32>
    %55 = arith.mulf %53, %54 : vector<2x1x10xf32>
    %c0_20 = arith.constant 0 : index
    %c0_21 = arith.constant 0 : index
    %c0_22 = arith.constant 0 : index
    %56 = vector.load %arg7[%c0_20, %c0_21, %c0_22] : memref<2x1x128xf32, #tpu.memory_space<vmem>>, vector<2x1x10xf32>
    tpu.vector_store %arg7[%c0_20, %c0_21, %c0_22], %55 {strides = array<i32>} : memref<2x1x128xf32, #tpu.memory_space<vmem>>, vector<2x1x10xf32>,
    return
  }
  func.func @transform_0(%arg0: i32) -> (i32, i32) {
    %c0_i32 = arith.constant 0 : i32
    %c0_i32_0 = arith.constant 0 : i32
    %c0_i32_1 = arith.constant 0 : i32
    return %c0_i32, %c0_i32_0 : i32, i32
  }
  func.func @transform_1(%arg0: i32) -> (i32, i32) {
    %c0_i32 = arith.constant 0 : i32
    %c0_i32_0 = arith.constant 0 : i32
    %c0_i32_1 = arith.constant 0 : i32
    return %c0_i32, %c0_i32_0 : i32, i32
  }
  func.func @transform_2(%arg0: i32) -> (i32, i32) {
    %c0_i32 = arith.constant 0 : i32
    %c0_i32_0 = arith.constant 0 : i32
    %c0_i32_1 = arith.constant 0 : i32
    return %c0_i32, %c0_i32_0 : i32, i32
  }
  func.func @transform_3(%arg0: i32) -> (i32, i32) {
    %c0_i32 = arith.constant 0 : i32
    %c0_i32_0 = arith.constant 0 : i32
    %c0_i32_1 = arith.constant 0 : i32
    return %c0_i32, %c0_i32_0 : i32, i32
  }
  func.func @transform_4(%arg0: i32) -> (i32, i32) {
    %c0_i32 = arith.constant 0 : i32
    %c0_i32_0 = arith.constant 0 : i32
    %c0_i32_1 = arith.constant 0 : i32
    return %c0_i32, %c0_i32_0 : i32, i32
  }
  func.func @transform_5(%arg0: i32) -> (i32, i32) {
    %c0_i32 = arith.constant 0 : i32
    %c0_i32_0 = arith.constant 0 : i32
    %c0_i32_1 = arith.constant 0 : i32
    return %c0_i32, %c0_i32_0 : i32, i32
  }
  func.func @transform_6(%arg0: i32) -> (i32, i32, i32) {
    %c0_i32 = arith.constant 0 : i32
    %c0_i32_0 = arith.constant 0 : i32
    %c0_i32_1 = arith.constant 0 : i32
    %c0_i32_2 = arith.constant 0 : i32
    return %c0_i32, %c0_i32_0, %c0_i32_1 : i32, i32, i32
  }
}

</mosaic_0001>

<llo_original>
// kernel: attention_forward.1
$region0: #{attention_forward.1}
  #allocation0 [shape = 'u32[]', space=smem, size = 0x4, offset = 0x4, fixed_abs, tag = 'smem constant byte address 0x4 - core index']
  #allocation1 [shape = 'u32[72,128]{1,0:T(1,128)}', space=vmem, size = 0x9000, scoped, tag = 'internal scratch']
  %s0 = inlined_call_operand.vmem [shape: f32[2,256], index: 0, kind: input, shape index: {}]
  %s1 = inlined_call_operand.vmem [shape: f32[20,256], index: 1, kind: input, shape index: {}]
  %s2 = inlined_call_operand.hbm [shape: f32[256,256], index: 2, kind: input, shape index: {}]
  %s3 = inlined_call_operand.vmem [shape: f32[1,256], index: 3, kind: input, shape index: {}]
  %s4 = inlined_call_operand.hbm [shape: f32[256,256], index: 4, kind: input, shape index: {}]
  %s5 = inlined_call_operand.vmem [shape: f32[1,256], index: 5, kind: input, shape index: {}]
  %s6 = inlined_call_operand.hbm [shape: f32[2,1,128], index: 6, kind: output, shape index: {}]
  %s7 = sld [smem:[#allocation0]]
  $region42: #{attention_forward.1} parent=0
    _
  %s9 = ssub.s32 1, %s7
  %s10 = scalar_select 0, %s9, %s7
  $region1: #{attention_forward.1} parent=0
    #allocation2 [shape = 'u8[262144]{0}', space=vmem, size = 0x40000, scoped, tag = 'input window, operand 2, single buffered']
    #allocation3 [shape = 's32[1]{0}', space=sflag, size = 0x4, scoped, tag = 'scoped memory for attention_forward.1']
    #allocation4 [shape = 's32[1]{0}', space=sflag, size = 0x4, scoped, tag = 'scoped memory for attention_forward.1']
    #allocation5 [shape = 'u8[262144]{0}', space=vmem, size = 0x40000, scoped, tag = 'input window, operand 4, single buffered']
    #allocation6 [shape = 's32[1]{0}', space=sflag, size = 0x4, scoped, tag = 'scoped memory for attention_forward.1']
    #allocation7 [shape = 'u8[1024]{0}', space=vmem, size = 0x400, scoped, tag = 'output window, operand 0, single buffered']
    %11 = vsyncpa [#allocation3], 0
    %12 = vsyncpa [#allocation6], 0
    %13 = vsyncpa [#allocation4], 0
    // Predicated region
    $region2: #{attention_forward.1} parent=1 // pred_check
      _
    $region3: #{attention_forward.1} parent=1 // pred_check_branch
      %15 = sbr.rel (0) target = $region5
    $region4: #{attention_forward.1} parent=1 // pred_region
      _
    $region5: #{attention_forward.1} parent=1 // pred_fallthru
      _
    // Predicated region
    $region6: #{attention_forward.1} parent=1 // pred_check
      _
    $region7: #{attention_forward.1} parent=1 // pred_check_branch
      %17 = sbr.rel (0) target = $region9
    $region8: #{attention_forward.1} parent=1 // pred_region
      _
    $region9: #{attention_forward.1} parent=1 // pred_fallthru
      _
    // Predicated region
    $region10: #{attention_forward.1} parent=1 // pred_check
      _
    $region11: #{attention_forward.1} parent=1 // pred_check_branch
      %19 = sbr.rel (0) target = $region13
    $region12: #{attention_forward.1} parent=1 // pred_region
      %21 = vsyncadd [#allocation3], 0
      %s22 = sshll.u32 %s2, 4
      %s23 = int_to_ptr.hbm [resolvable:$true] %s22
      %s24 = sshll.u32 [#allocation2], 4
      %s25 = int_to_ptr.vmem [resolvable:$true] %s24
      %30 = dma.hbm_to_vmem [thread:$0]  %s23, 8192, %s25, [#allocation3], 256, 256, 16
    $region13: #{attention_forward.1} parent=1 // pred_fallthru
      _
    // Predicated region
    $region14: #{attention_forward.1} parent=1 // pred_check
      _
    $region15: #{attention_forward.1} parent=1 // pred_check_branch
      %32 = sbr.rel (0) target = $region17
    $region16: #{attention_forward.1} parent=1 // pred_region
      _
    $region17: #{attention_forward.1} parent=1 // pred_fallthru
      _
    // Predicated region
    $region18: #{attention_forward.1} parent=1 // pred_check
      _
    $region19: #{attention_forward.1} parent=1 // pred_check_branch
      %34 = sbr.rel (0) target = $region21
    $region20: #{attention_forward.1} parent=1 // pred_region
      %36 = vsyncadd [#allocation6], 0
      %s37 = sshll.u32 %s4, 4
      %s38 = int_to_ptr.hbm [resolvable:$true] %s37
      %s39 = sshll.u32 [#allocation5], 4
      %s40 = int_to_ptr.vmem [resolvable:$true] %s39
      %45 = dma.hbm_to_vmem [thread:$0]  %s38, 8192, %s40, [#allocation6], 256, 256, 16
    $region21: #{attention_forward.1} parent=1 // pred_fallthru
      _
    // Predicated region
    $region22: #{attention_forward.1} parent=1 // pred_check
      _
    $region23: #{attention_forward.1} parent=1 // pred_check_branch
      %47 = sbr.rel (0) target = $region25
    $region24: #{attention_forward.1} parent=1 // pred_region
      _
    $region25: #{attention_forward.1} parent=1 // pred_fallthru
      _
    // Predicated region
    $region26: #{attention_forward.1} parent=1 // pred_check
      _
    $region27: #{attention_forward.1} parent=1 // pred_check_branch
      %49 = sbr.rel (0) target = $region29
    $region28: #{attention_forward.1} parent=1 // pred_region
      %51 = dma.done [#allocation3], 8192
    $region29: #{attention_forward.1} parent=1 // pred_fallthru
      _
    // Predicated region
    $region30: #{attention_forward.1} parent=1 // pred_check
      _
    $region31: #{attention_forward.1} parent=1 // pred_check_branch
      %53 = sbr.rel (0) target = $region33
    $region32: #{attention_forward.1} parent=1 // pred_region
      %55 = dma.done [#allocation6], 8192
    $region33: #{attention_forward.1} parent=1 // pred_fallthru
      _
    %v56 = vld [vmem:[%s0] sm:$0xf]
    %v57 = vld [vmem:[#allocation2] sm:$0xff]
    %v58 = vld [vmem:[#allocation2 + $0x8] sm:$0xff]
    %v59 = vld [vmem:[#allocation2 + $0x10] sm:$0xff]
    %v60 = vld [vmem:[#allocation2 + $0x18] sm:$0xff]
    %v61 = vld [vmem:[#allocation2 + $0x20] sm:$0xff]
    %v62 = vld [vmem:[#allocation2 + $0x28] sm:$0xff]
    %v63 = vld [vmem:[#allocation2 + $0x30] sm:$0xff]
    %v64 = vld [vmem:[#allocation2 + $0x38] sm:$0xff]
    %v65 = vld [vmem:[#allocation2 + $0x40] sm:$0xff]
    %v66 = vld [vmem:[#allocation2 + $0x48] sm:$0xff]
    %v67 = vld [vmem:[#allocation2 + $0x50] sm:$0xff]
    %v68 = vld [vmem:[#allocation2 + $0x58] sm:$0xff]
    %v69 = vld [vmem:[#allocation2 + $0x60] sm:$0xff]
    %v70 = vld [vmem:[#allocation2 + $0x68] sm:$0xff]
    %v71 = vld [vmem:[#allocation2 + $0x70] sm:$0xff]
    %v72 = vld [vmem:[#allocation2 + $0x78] sm:$0xff]
    %v73 = vld [vmem:[#allocation2 + $0x80] sm:$0xff]
    %v74 = vld [vmem:[#allocation2 + $0x88] sm:$0xff]
    %v75 = vld [vmem:[#allocation2 + $0x90] sm:$0xff]
    %v76 = vld [vmem:[#allocation2 + $0x98] sm:$0xff]
    %v77 = vld [vmem:[#allocation2 + $0xa0] sm:$0xff]
    %v78 = vld [vmem:[#allocation2 + $0xa8] sm:$0xff]
    %v79 = vld [vmem:[#allocation2 + $0xb0] sm:$0xff]
    %v80 = vld [vmem:[#allocation2 + $0xb8] sm:$0xff]
    %v81 = vld [vmem:[#allocation2 + $0xc0] sm:$0xff]
    %v82 = vld [vmem:[#allocation2 + $0xc8] sm:$0xff]
    %v83 = vld [vmem:[#allocation2 + $0xd0] sm:$0xff]
    %v84 = vld [vmem:[#allocation2 + $0xd8] sm:$0xff]
    %v85 = vld [vmem:[#allocation2 + $0xe0] sm:$0xff]
    %v86 = vld [vmem:[#allocation2 + $0xe8] sm:$0xff]
    %v87 = vld [vmem:[#allocation2 + $0xf0] sm:$0xff]
    %v88 = vld [vmem:[#allocation2 + $0xf8] sm:$0xff]
    %v89 = vld [vmem:[#allocation2 + $0x100] sm:$0xff]
    %v90 = vld [vmem:[#allocation2 + $0x108] sm:$0xff]
    %v91 = vld [vmem:[#allocation2 + $0x110] sm:$0xff]
    %v92 = vld [vmem:[#allocation2 + $0x118] sm:$0xff]
    %v93 = vld [vmem:[#allocation2 + $0x120] sm:$0xff]
    %v94 = vld [vmem:[#allocation2 + $0x128] sm:$0xff]
    %v95 = vld [vmem:[#allocation2 + $0x130] sm:$0xff]
    %v96 = vld [vmem:[#allocation2 + $0x138] sm:$0xff]
    %v97 = vld [vmem:[#allocation2 + $0x140] sm:$0xff]
    %v98 = vld [vmem:[#allocation2 + $0x148] sm:$0xff]
    %v99 = vld [vmem:[#allocation2 + $0x150] sm:$0xff]
    %v100 = vld [vmem:[#allocation2 + $0x158] sm:$0xff]
    %v101 = vld [vmem:[#allocation2 + $0x160] sm:$0xff]
    %v102 = vld [vmem:[#allocation2 + $0x168] sm:$0xff]
    %v103 = vld [vmem:[#allocation2 + $0x170] sm:$0xff]
    %v104 = vld [vmem:[#allocation2 + $0x178] sm:$0xff]
    %v105 = vld [vmem:[#allocation2 + $0x180] sm:$0xff]
    %v106 = vld [vmem:[#allocation2 + $0x188] sm:$0xff]
    %v107 = vld [vmem:[#allocation2 + $0x190] sm:$0xff]
    %v108 = vld [vmem:[#allocation2 + $0x198] sm:$0xff]
    %v109 = vld [vmem:[#allocation2 + $0x1a0] sm:$0xff]
    %v110 = vld [vmem:[#allocation2 + $0x1a8] sm:$0xff]
    %v111 = vld [vmem:[#allocation2 + $0x1b0] sm:$0xff]
    %v112 = vld [vmem:[#allocation2 + $0x1b8] sm:$0xff]
    %v113 = vld [vmem:[#allocation2 + $0x1c0] sm:$0xff]
    %v114 = vld [vmem:[#allocation2 + $0x1c8] sm:$0xff]
    %v115 = vld [vmem:[#allocation2 + $0x1d0] sm:$0xff]
    %v116 = vld [vmem:[#allocation2 + $0x1d8] sm:$0xff]
    %v117 = vld [vmem:[#allocation2 + $0x1e0] sm:$0xff]
    %v118 = vld [vmem:[#allocation2 + $0x1e8] sm:$0xff]
    %v119 = vld [vmem:[#allocation2 + $0x1f0] sm:$0xff]
    %v120 = vld [vmem:[#allocation2 + $0x1f8] sm:$0xff]
    %v121 = vld [vmem:[%s3] sm:$0x3]
    %v123 = vperm.slane %v121, 0
    %v124 = vperm.slane %v121, 1
    %128 = vst [vmem:[#allocation1] ss:$4 sm:$0xff] %v56
    %v129 = vld.sshfl [vmem:[#allocation1] sm:$0xff pattern:$0x73625140]
    %v130 = vld.sshfl [vmem:[#allocation1 + $0x8] sm:$0xff pattern:$0x73625140]
    %133 = vmatpush.msra.mxu0 %v87
    %134 = vmatpush.msra.mxu0 %v85
    %135 = vmatpush.msra.mxu0 %v83
    %136 = vmatpush.msra.mxu0 %v81
    %137 = vmatpush.msra.mxu0 %v79
    %138 = vmatpush.msra.mxu0 %v77
    %139 = vmatpush.msra.mxu0 %v75
    %140 = vmatpush.msra.mxu0 %v73
    %141 = vmatpush.msra.mxu0 %v71
    %142 = vmatpush.msra.mxu0 %v69
    %143 = vmatpush.msra.mxu0 %v67
    %144 = vmatpush.msra.mxu0 %v65
    %145 = vmatpush.msra.mxu0 %v63
    %146 = vmatpush.msra.mxu0 %v61
    %147 = vmatpush.msra.mxu0 %v59
    %148 = vmatpush.msra.mxu0 %v57
    %149 = vmatmul.f32.gmra.mxu0 %v129
    %v150 = vpop.f32.mrf.mxu0
    %v151 = vadd.f32 %v123, %v150
    %152 = vdwg.mxu0
    %153 = vmatpush.msra.mxu0 %v119
    %154 = vmatpush.msra.mxu0 %v117
    %155 = vmatpush.msra.mxu0 %v115
    %156 = vmatpush.msra.mxu0 %v113
    %157 = vmatpush.msra.mxu0 %v111
    %158 = vmatpush.msra.mxu0 %v109
    %159 = vmatpush.msra.mxu0 %v107
    %160 = vmatpush.msra.mxu0 %v105
    %161 = vmatpush.msra.mxu0 %v103
    %162 = vmatpush.msra.mxu0 %v101
    %163 = vmatpush.msra.mxu0 %v99
    %164 = vmatpush.msra.mxu0 %v97
    %165 = vmatpush.msra.mxu0 %v95
    %166 = vmatpush.msra.mxu0 %v93
    %167 = vmatpush.msra.mxu0 %v91
    %168 = vmatpush.msra.mxu0 %v89
    %169 = vmatmul.f32.gmra.mxu0 %v130
    %v170 = vpop.f32.mrf.mxu0
    %v171 = vadd.f32 %v151, %v170
    %172 = vdwg.mxu0
    %173 = vmatpush.msra.mxu0 %v88
    %174 = vmatpush.msra.mxu0 %v86
    %175 = vmatpush.msra.mxu0 %v84
    %176 = vmatpush.msra.mxu0 %v82
    %177 = vmatpush.msra.mxu0 %v80
    %178 = vmatpush.msra.mxu0 %v78
    %179 = vmatpush.msra.mxu0 %v76
    %180 = vmatpush.msra.mxu0 %v74
    %181 = vmatpush.msra.mxu0 %v72
    %182 = vmatpush.msra.mxu0 %v70
    %183 = vmatpush.msra.mxu0 %v68
    %184 = vmatpush.msra.mxu0 %v66
    %185 = vmatpush.msra.mxu0 %v64
    %186 = vmatpush.msra.mxu0 %v62
    %187 = vmatpush.msra.mxu0 %v60
    %188 = vmatpush.msra.mxu0 %v58
    %189 = vmatmul.f32.gmra.mxu0 %v129
    %v190 = vpop.f32.mrf.mxu0
    %v191 = vadd.f32 %v124, %v190
    %192 = vdwg.mxu0
    %193 = vmatpush.msra.mxu0 %v120
    %194 = vmatpush.msra.mxu0 %v118
    %195 = vmatpush.msra.mxu0 %v116
    %196 = vmatpush.msra.mxu0 %v114
    %197 = vmatpush.msra.mxu0 %v112
    %198 = vmatpush.msra.mxu0 %v110
    %199 = vmatpush.msra.mxu0 %v108
    %200 = vmatpush.msra.mxu0 %v106
    %201 = vmatpush.msra.mxu0 %v104
    %202 = vmatpush.msra.mxu0 %v102
    %203 = vmatpush.msra.mxu0 %v100
    %204 = vmatpush.msra.mxu0 %v98
    %205 = vmatpush.msra.mxu0 %v96
    %206 = vmatpush.msra.mxu0 %v94
    %207 = vmatpush.msra.mxu0 %v92
    %208 = vmatpush.msra.mxu0 %v90
    %209 = vmatmul.f32.gmra.mxu0 %v130
    %v210 = vpop.f32.mrf.mxu0
    %v211 = vadd.f32 %v191, %v210
    %212 = vdwg.mxu0
    %v213 = vmul.f32 %v171, 0.125
    %v214 = vmul.f32 %v211, 0.125
    %v215 = vld [vmem:[%s1] sm:$0xff]
    %v216 = vld [vmem:[%s1 + $0x8] sm:$0xff]
    %v217 = vld [vmem:[%s1 + $0x10] sm:$0xff]
    %v218 = vld [vmem:[%s1 + $0x18] sm:$0xff]
    %v219 = vld [vmem:[%s1 + $0x20] sm:$0xf]
    %v220 = vld [vmem:[%s1 + $0x28] sm:$0xf]
    %v221 = vld [vmem:[#allocation5] sm:$0xff]
    %v222 = vld [vmem:[#allocation5 + $0x8] sm:$0xff]
    %v223 = vld [vmem:[#allocation5 + $0x10] sm:$0xff]
    %v224 = vld [vmem:[#allocation5 + $0x18] sm:$0xff]
    %v225 = vld [vmem:[#allocation5 + $0x20] sm:$0xff]
    %v226 = vld [vmem:[#allocation5 + $0x28] sm:$0xff]
    %v227 = vld [vmem:[#allocation5 + $0x30] sm:$0xff]
    %v228 = vld [vmem:[#allocation5 + $0x38] sm:$0xff]
    %v229 = vld [vmem:[#allocation5 + $0x40] sm:$0xff]
    %v230 = vld [vmem:[#allocation5 + $0x48] sm:$0xff]
    %v231 = vld [vmem:[#allocation5 + $0x50] sm:$0xff]
    %v232 = vld [vmem:[#allocation5 + $0x58] sm:$0xff]
    %v233 = vld [vmem:[#allocation5 + $0x60] sm:$0xff]
    %v234 = vld [vmem:[#allocation5 + $0x68] sm:$0xff]
    %v235 = vld [vmem:[#allocation5 + $0x70] sm:$0xff]
    %v236 = vld [vmem:[#allocation5 + $0x78] sm:$0xff]
    %v237 = vld [vmem:[#allocation5 + $0x80] sm:$0xff]
    %v238 = vld [vmem:[#allocation5 + $0x88] sm:$0xff]
    %v239 = vld [vmem:[#allocation5 + $0x90] sm:$0xff]
    %v240 = vld [vmem:[#allocation5 + $0x98] sm:$0xff]
    %v241 = vld [vmem:[#allocation5 + $0xa0] sm:$0xff]
    %v242 = vld [vmem:[#allocation5 + $0xa8] sm:$0xff]
    %v243 = vld [vmem:[#allocation5 + $0xb0] sm:$0xff]
    %v244 = vld [vmem:[#allocation5 + $0xb8] sm:$0xff]
    %v245 = vld [vmem:[#allocation5 + $0xc0] sm:$0xff]
    %v246 = vld [vmem:[#allocation5 + $0xc8] sm:$0xff]
    %v247 = vld [vmem:[#allocation5 + $0xd0] sm:$0xff]
    %v248 = vld [vmem:[#allocation5 + $0xd8] sm:$0xff]
    %v249 = vld [vmem:[#allocation5 + $0xe0] sm:$0xff]
    %v250 = vld [vmem:[#allocation5 + $0xe8] sm:$0xff]
    %v251 = vld [vmem:[#allocation5 + $0xf0] sm:$0xff]
    %v252 = vld [vmem:[#allocation5 + $0xf8] sm:$0xff]
    %v253 = vld [vmem:[#allocation5 + $0x100] sm:$0xff]
    %v254 = vld [vmem:[#allocation5 + $0x108] sm:$0xff]
    %v255 = vld [vmem:[#allocation5 + $0x110] sm:$0xff]
    %v256 = vld [vmem:[#allocation5 + $0x118] sm:$0xff]
    %v257 = vld [vmem:[#allocation5 + $0x120] sm:$0xff]
    %v258 = vld [vmem:[#allocation5 + $0x128] sm:$0xff]
    %v259 = vld [vmem:[#allocation5 + $0x130] sm:$0xff]
    %v260 = vld [vmem:[#allocation5 + $0x138] sm:$0xff]
    %v261 = vld [vmem:[#allocation5 + $0x140] sm:$0xff]
    %v262 = vld [vmem:[#allocation5 + $0x148] sm:$0xff]
    %v263 = vld [vmem:[#allocation5 + $0x150] sm:$0xff]
    %v264 = vld [vmem:[#allocation5 + $0x158] sm:$0xff]
    %v265 = vld [vmem:[#allocation5 + $0x160] sm:$0xff]
    %v266 = vld [vmem:[#allocation5 + $0x168] sm:$0xff]
    %v267 = vld [vmem:[#allocation5 + $0x170] sm:$0xff]
    %v268 = vld [vmem:[#allocation5 + $0x178] sm:$0xff]
    %v269 = vld [vmem:[#allocation5 + $0x180] sm:$0xff]
    %v270 = vld [vmem:[#allocation5 + $0x188] sm:$0xff]
    %v271 = vld [vmem:[#allocation5 + $0x190] sm:$0xff]
    %v272 = vld [vmem:[#allocation5 + $0x198] sm:$0xff]
    %v273 = vld [vmem:[#allocation5 + $0x1a0] sm:$0xff]
    %v274 = vld [vmem:[#allocation5 + $0x1a8] sm:$0xff]
    %v275 = vld [vmem:[#allocation5 + $0x1b0] sm:$0xff]
    %v276 = vld [vmem:[#allocation5 + $0x1b8] sm:$0xff]
    %v277 = vld [vmem:[#allocation5 + $0x1c0] sm:$0xff]
    %v278 = vld [vmem:[#allocation5 + $0x1c8] sm:$0xff]
    %v279 = vld [vmem:[#allocation5 + $0x1d0] sm:$0xff]
    %v280 = vld [vmem:[#allocation5 + $0x1d8] sm:$0xff]
    %v281 = vld [vmem:[#allocation5 + $0x1e0] sm:$0xff]
    %v282 = vld [vmem:[#allocation5 + $0x1e8] sm:$0xff]
    %v283 = vld [vmem:[#allocation5 + $0x1f0] sm:$0xff]
    %v284 = vld [vmem:[#allocation5 + $0x1f8] sm:$0xff]
    %v285 = vld [vmem:[%s5] sm:$0x3]
    %v287 = vperm.slane %v285, 0
    %v288 = vperm.slane %v285, 1
    %291 = vmatpush.msra.mxu0 %v251
    %292 = vmatpush.msra.mxu0 %v249
    %293 = vmatpush.msra.mxu0 %v247
    %294 = vmatpush.msra.mxu0 %v245
    %295 = vmatpush.msra.mxu0 %v243
    %296 = vmatpush.msra.mxu0 %v241
    %297 = vmatpush.msra.mxu0 %v239
    %298 = vmatpush.msra.mxu0 %v237
    %299 = vmatpush.msra.mxu0 %v235
    %300 = vmatpush.msra.mxu0 %v233
    %301 = vmatpush.msra.mxu0 %v231
    %302 = vmatpush.msra.mxu0 %v229
    %303 = vmatpush.msra.mxu0 %v227
    %304 = vmatpush.msra.mxu0 %v225
    %305 = vmatpush.msra.mxu0 %v223
    %306 = vmatpush.msra.mxu0 %v221
    %307 = vmatmul.f32.gmra.mxu0 %v215
    %v308 = vpop.f32.mrf.mxu0
    %v309 = vadd.f32 %v287, %v308
    %310 = vmatmul.f32.gmra.mxu0 %v217
    %v311 = vpop.f32.mrf.mxu0
    %v312 = vadd.f32 %v287, %v311
    %313 = vmatmul.f32.gmra.mxu0 %v219
    %v314 = vpop.f32.mrf.mxu0
    %v315 = vadd.f32 %v287, %v314
    %316 = vdwg.mxu0
    %317 = vmatpush.msra.mxu0 %v283
    %318 = vmatpush.msra.mxu0 %v281
    %319 = vmatpush.msra.mxu0 %v279
    %320 = vmatpush.msra.mxu0 %v277
    %321 = vmatpush.msra.mxu0 %v275
    %322 = vmatpush.msra.mxu0 %v273
    %323 = vmatpush.msra.mxu0 %v271
    %324 = vmatpush.msra.mxu0 %v269
    %325 = vmatpush.msra.mxu0 %v267
    %326 = vmatpush.msra.mxu0 %v265
    %327 = vmatpush.msra.mxu0 %v263
    %328 = vmatpush.msra.mxu0 %v261
    %329 = vmatpush.msra.mxu0 %v259
    %330 = vmatpush.msra.mxu0 %v257
    %331 = vmatpush.msra.mxu0 %v255
    %332 = vmatpush.msra.mxu0 %v253
    %333 = vmatmul.f32.gmra.mxu0 %v216
    %v334 = vpop.f32.mrf.mxu0
    %v335 = vadd.f32 %v309, %v334
    %336 = vmatmul.f32.gmra.mxu0 %v218
    %v337 = vpop.f32.mrf.mxu0
    %v338 = vadd.f32 %v312, %v337
    %339 = vmatmul.f32.gmra.mxu0 %v220
    %v340 = vpop.f32.mrf.mxu0
    %v341 = vadd.f32 %v315, %v340
    %342 = vdwg.mxu0
    %343 = vmatpush.msra.mxu0 %v252
    %344 = vmatpush.msra.mxu0 %v250
    %345 = vmatpush.msra.mxu0 %v248
    %346 = vmatpush.msra.mxu0 %v246
    %347 = vmatpush.msra.mxu0 %v244
    %348 = vmatpush.msra.mxu0 %v242
    %349 = vmatpush.msra.mxu0 %v240
    %350 = vmatpush.msra.mxu0 %v238
    %351 = vmatpush.msra.mxu0 %v236
    %352 = vmatpush.msra.mxu0 %v234
    %353 = vmatpush.msra.mxu0 %v232
    %354 = vmatpush.msra.mxu0 %v230
    %355 = vmatpush.msra.mxu0 %v228
    %356 = vmatpush.msra.mxu0 %v226
    %357 = vmatpush.msra.mxu0 %v224
    %358 = vmatpush.msra.mxu0 %v222
    %359 = vmatmul.f32.gmra.mxu0 %v215
    %v360 = vpop.f32.mrf.mxu0
    %v361 = vadd.f32 %v288, %v360
    %362 = vmatmul.f32.gmra.mxu0 %v217
    %v363 = vpop.f32.mrf.mxu0
    %v364 = vadd.f32 %v288, %v363
    %365 = vmatmul.f32.gmra.mxu0 %v219
    %v366 = vpop.f32.mrf.mxu0
    %v367 = vadd.f32 %v288, %v366
    %368 = vdwg.mxu0
    %369 = vmatpush.msra.mxu0 %v284
    %370 = vmatpush.msra.mxu0 %v282
    %371 = vmatpush.msra.mxu0 %v280
    %372 = vmatpush.msra.mxu0 %v278
    %373 = vmatpush.msra.mxu0 %v276
    %374 = vmatpush.msra.mxu0 %v274
    %375 = vmatpush.msra.mxu0 %v272
    %376 = vmatpush.msra.mxu0 %v270
    %377 = vmatpush.msra.mxu0 %v268
    %378 = vmatpush.msra.mxu0 %v266
    %379 = vmatpush.msra.mxu0 %v264
    %380 = vmatpush.msra.mxu0 %v262
    %381 = vmatpush.msra.mxu0 %v260
    %382 = vmatpush.msra.mxu0 %v258
    %383 = vmatpush.msra.mxu0 %v256
    %384 = vmatpush.msra.mxu0 %v254
    %385 = vmatmul.f32.gmra.mxu0 %v216
    %v386 = vpop.f32.mrf.mxu0
    %v387 = vadd.f32 %v361, %v386
    %388 = vmatmul.f32.gmra.mxu0 %v218
    %v389 = vpop.f32.mrf.mxu0
    %v390 = vadd.f32 %v364, %v389
    %391 = vmatmul.f32.gmra.mxu0 %v220
    %v392 = vpop.f32.mrf.mxu0
    %v393 = vadd.f32 %v367, %v392
    %394 = vdwg.mxu0
    %v397 = vrot.slane %v213, 1
    %v398 = vrot.slane %v214, 1
    %vm403 = vcmask 1045504
    %v404 = vrot.slane %v338, 2
    %v405 = vrot.slane %v341, 2
    %v406 = vsel %vm403, %v404, %v405
    %v407 = vrot.slane %v390, 2
    %v408 = vrot.slane %v393, 2
    %v409 = vsel %vm403, %v407, %v408
    %vm410 = vcmask 523264
    %v411 = vsel %vm410, %v213, 0
    %v414 = vsel %vm410, %v335, 0
    %v416 = vsel %vm410, %v338, 0
    %418 = vmatpush.xpose.msra.mxu0 0.0
    %419 = vmatpush.xpose.msra.mxu0 0.0
    %420 = vmatpush.xpose.msra.mxu0 0.0
    %421 = vmatpush.xpose.msra.mxu0 0.0
    %422 = vmatpush.xpose.msra.mxu0 0.0
    %423 = vmatpush.xpose.msra.mxu0 0.0
    %424 = vmatpush.xpose.msra.mxu0 0.0
    %425 = vmatpush.xpose.msra.mxu0 0.0
    %426 = vmatpush.xpose.msra.mxu0 0.0
    %427 = vmatpush.xpose.msra.mxu0 0.0
    %428 = vmatpush.xpose.msra.mxu0 0.0
    %429 = vmatpush.xpose.msra.mxu0 0.0
    %430 = vmatpush.xpose.msra.mxu0 0.0
    %431 = vmatpush.xpose.msra.mxu0 0.0
    %432 = vmatpush.xpose.msra.mxu0 %v416
    %433 = vmatpush.xpose.msra.mxu0 %v414
    %434 = vmatmul.f32.gmra.mxu0 %v411
    %v435 = vpop.f32.mrf.mxu0
    %v436 = vadd.f32 0.0, %v435
    %437 = vdwg.mxu0
    %v438 = vsel %vm410, %v397, 0
    %v440 = vsel %vm410, %v406, 0
    %v442 = vsel %vm410, %v405, 0
    %444 = vmatpush.xpose.msra.mxu0 0.0
    %445 = vmatpush.xpose.msra.mxu0 0.0
    %446 = vmatpush.xpose.msra.mxu0 0.0
    %447 = vmatpush.xpose.msra.mxu0 0.0
    %448 = vmatpush.xpose.msra.mxu0 0.0
    %449 = vmatpush.xpose.msra.mxu0 0.0
    %450 = vmatpush.xpose.msra.mxu0 0.0
    %451 = vmatpush.xpose.msra.mxu0 0.0
    %452 = vmatpush.xpose.msra.mxu0 0.0
    %453 = vmatpush.xpose.msra.mxu0 0.0
    %454 = vmatpush.xpose.msra.mxu0 0.0
    %455 = vmatpush.xpose.msra.mxu0 0.0
    %456 = vmatpush.xpose.msra.mxu0 0.0
    %457 = vmatpush.xpose.msra.mxu0 0.0
    %458 = vmatpush.xpose.msra.mxu0 %v442
    %459 = vmatpush.xpose.msra.mxu0 %v440
    %460 = vmatmul.f32.gmra.mxu0 %v438
    %v461 = vpop.f32.mrf.mxu0
    %v462 = vadd.f32 0.0, %v461
    %463 = vdwg.mxu0
    %464 = vrot.lane.b32.xlu0 %v213, 64
    %v465 = vpop.permute.xlu0 %464
    %466 = vrot.lane.b32.xlu0 %v335, 64
    %v467 = vpop.permute.xlu0 %466
    %468 = vrot.lane.b32.xlu0 %v338, 64
    %v469 = vpop.permute.xlu0 %468
    %v470 = vsel %vm410, %v465, 0
    %v472 = vsel %vm410, %v467, 0
    %v474 = vsel %vm410, %v469, 0
    %476 = vmatpush.xpose.msra.mxu0 0.0
    %477 = vmatpush.xpose.msra.mxu0 0.0
    %478 = vmatpush.xpose.msra.mxu0 0.0
    %479 = vmatpush.xpose.msra.mxu0 0.0
    %480 = vmatpush.xpose.msra.mxu0 0.0
    %481 = vmatpush.xpose.msra.mxu0 0.0
    %482 = vmatpush.xpose.msra.mxu0 0.0
    %483 = vmatpush.xpose.msra.mxu0 0.0
    %484 = vmatpush.xpose.msra.mxu0 0.0
    %485 = vmatpush.xpose.msra.mxu0 0.0
    %486 = vmatpush.xpose.msra.mxu0 0.0
    %487 = vmatpush.xpose.msra.mxu0 0.0
    %488 = vmatpush.xpose.msra.mxu0 0.0
    %489 = vmatpush.xpose.msra.mxu0 0.0
    %490 = vmatpush.xpose.msra.mxu0 %v474
    %491 = vmatpush.xpose.msra.mxu0 %v472
    %492 = vmatmul.f32.gmra.mxu0 %v470
    %v493 = vpop.f32.mrf.mxu0
    %v494 = vadd.f32 0.0, %v493
    %495 = vdwg.mxu0
    %496 = vrot.lane.b32.xlu0 %v397, 64
    %v497 = vpop.permute.xlu0 %496
    %498 = vrot.lane.b32.xlu0 %v406, 64
    %v499 = vpop.permute.xlu0 %498
    %500 = vrot.lane.b32.xlu0 %v405, 64
    %v501 = vpop.permute.xlu0 %500
    %v502 = vsel %vm410, %v497, 0
    %v504 = vsel %vm410, %v499, 0
    %v506 = vsel %vm410, %v501, 0
    %508 = vmatpush.xpose.msra.mxu0 0.0
    %509 = vmatpush.xpose.msra.mxu0 0.0
    %510 = vmatpush.xpose.msra.mxu0 0.0
    %511 = vmatpush.xpose.msra.mxu0 0.0
    %512 = vmatpush.xpose.msra.mxu0 0.0
    %513 = vmatpush.xpose.msra.mxu0 0.0
    %514 = vmatpush.xpose.msra.mxu0 0.0
    %515 = vmatpush.xpose.msra.mxu0 0.0
    %516 = vmatpush.xpose.msra.mxu0 0.0
    %517 = vmatpush.xpose.msra.mxu0 0.0
    %518 = vmatpush.xpose.msra.mxu0 0.0
    %519 = vmatpush.xpose.msra.mxu0 0.0
    %520 = vmatpush.xpose.msra.mxu0 0.0
    %521 = vmatpush.xpose.msra.mxu0 0.0
    %522 = vmatpush.xpose.msra.mxu0 %v506
    %523 = vmatpush.xpose.msra.mxu0 %v504
    %524 = vmatmul.f32.gmra.mxu0 %v502
    %v525 = vpop.f32.mrf.mxu0
    %v526 = vadd.f32 0.0, %v525
    %527 = vdwg.mxu0
    %v528 = vsel %vm410, %v214, 0
    %v531 = vsel %vm410, %v387, 0
    %v533 = vsel %vm410, %v390, 0
    %535 = vmatpush.xpose.msra.mxu0 0.0
    %536 = vmatpush.xpose.msra.mxu0 0.0
    %537 = vmatpush.xpose.msra.mxu0 0.0
    %538 = vmatpush.xpose.msra.mxu0 0.0
    %539 = vmatpush.xpose.msra.mxu0 0.0
    %540 = vmatpush.xpose.msra.mxu0 0.0
    %541 = vmatpush.xpose.msra.mxu0 0.0
    %542 = vmatpush.xpose.msra.mxu0 0.0
    %543 = vmatpush.xpose.msra.mxu0 0.0
    %544 = vmatpush.xpose.msra.mxu0 0.0
    %545 = vmatpush.xpose.msra.mxu0 0.0
    %546 = vmatpush.xpose.msra.mxu0 0.0
    %547 = vmatpush.xpose.msra.mxu0 0.0
    %548 = vmatpush.xpose.msra.mxu0 0.0
    %549 = vmatpush.xpose.msra.mxu0 %v533
    %550 = vmatpush.xpose.msra.mxu0 %v531
    %551 = vmatmul.f32.gmra.mxu0 %v528
    %v552 = vpop.f32.mrf.mxu0
    %v553 = vadd.f32 0.0, %v552
    %554 = vdwg.mxu0
    %v555 = vsel %vm410, %v398, 0
    %v557 = vsel %vm410, %v409, 0
    %v559 = vsel %vm410, %v408, 0
    %561 = vmatpush.xpose.msra.mxu0 0.0
    %562 = vmatpush.xpose.msra.mxu0 0.0
    %563 = vmatpush.xpose.msra.mxu0 0.0
    %564 = vmatpush.xpose.msra.mxu0 0.0
    %565 = vmatpush.xpose.msra.mxu0 0.0
    %566 = vmatpush.xpose.msra.mxu0 0.0
    %567 = vmatpush.xpose.msra.mxu0 0.0
    %568 = vmatpush.xpose.msra.mxu0 0.0
    %569 = vmatpush.xpose.msra.mxu0 0.0
    %570 = vmatpush.xpose.msra.mxu0 0.0
    %571 = vmatpush.xpose.msra.mxu0 0.0
    %572 = vmatpush.xpose.msra.mxu0 0.0
    %573 = vmatpush.xpose.msra.mxu0 0.0
    %574 = vmatpush.xpose.msra.mxu0 0.0
    %575 = vmatpush.xpose.msra.mxu0 %v559
    %576 = vmatpush.xpose.msra.mxu0 %v557
    %577 = vmatmul.f32.gmra.mxu0 %v555
    %v578 = vpop.f32.mrf.mxu0
    %v579 = vadd.f32 0.0, %v578
    %580 = vdwg.mxu0
    %581 = vrot.lane.b32.xlu0 %v214, 64
    %v582 = vpop.permute.xlu0 %581
    %583 = vrot.lane.b32.xlu0 %v387, 64
    %v584 = vpop.permute.xlu0 %583
    %585 = vrot.lane.b32.xlu0 %v390, 64
    %v586 = vpop.permute.xlu0 %585
    %v587 = vsel %vm410, %v582, 0
    %v589 = vsel %vm410, %v584, 0
    %v591 = vsel %vm410, %v586, 0
    %593 = vmatpush.xpose.msra.mxu0 0.0
    %594 = vmatpush.xpose.msra.mxu0 0.0
    %595 = vmatpush.xpose.msra.mxu0 0.0
    %596 = vmatpush.xpose.msra.mxu0 0.0
    %597 = vmatpush.xpose.msra.mxu0 0.0
    %598 = vmatpush.xpose.msra.mxu0 0.0
    %599 = vmatpush.xpose.msra.mxu0 0.0
    %600 = vmatpush.xpose.msra.mxu0 0.0
    %601 = vmatpush.xpose.msra.mxu0 0.0
    %602 = vmatpush.xpose.msra.mxu0 0.0
    %603 = vmatpush.xpose.msra.mxu0 0.0
    %604 = vmatpush.xpose.msra.mxu0 0.0
    %605 = vmatpush.xpose.msra.mxu0 0.0
    %606 = vmatpush.xpose.msra.mxu0 0.0
    %607 = vmatpush.xpose.msra.mxu0 %v591
    %608 = vmatpush.xpose.msra.mxu0 %v589
    %609 = vmatmul.f32.gmra.mxu0 %v587
    %v610 = vpop.f32.mrf.mxu0
    %v611 = vadd.f32 0.0, %v610
    %612 = vdwg.mxu0
    %613 = vrot.lane.b32.xlu0 %v398, 64
    %v614 = vpop.permute.xlu0 %613
    %615 = vrot.lane.b32.xlu0 %v409, 64
    %v616 = vpop.permute.xlu0 %615
    %617 = vrot.lane.b32.xlu0 %v408, 64
    %v618 = vpop.permute.xlu0 %617
    %v619 = vsel %vm410, %v614, 0
    %v621 = vsel %vm410, %v616, 0
    %v623 = vsel %vm410, %v618, 0
    %625 = vmatpush.xpose.msra.mxu0 0.0
    %626 = vmatpush.xpose.msra.mxu0 0.0
    %627 = vmatpush.xpose.msra.mxu0 0.0
    %628 = vmatpush.xpose.msra.mxu0 0.0
    %629 = vmatpush.xpose.msra.mxu0 0.0
    %630 = vmatpush.xpose.msra.mxu0 0.0
    %631 = vmatpush.xpose.msra.mxu0 0.0
    %632 = vmatpush.xpose.msra.mxu0 0.0
    %633 = vmatpush.xpose.msra.mxu0 0.0
    %634 = vmatpush.xpose.msra.mxu0 0.0
    %635 = vmatpush.xpose.msra.mxu0 0.0
    %636 = vmatpush.xpose.msra.mxu0 0.0
    %637 = vmatpush.xpose.msra.mxu0 0.0
    %638 = vmatpush.xpose.msra.mxu0 0.0
    %639 = vmatpush.xpose.msra.mxu0 %v623
    %640 = vmatpush.xpose.msra.mxu0 %v621
    %641 = vmatmul.f32.gmra.mxu0 %v619
    %v642 = vpop.f32.mrf.mxu0
    %v643 = vadd.f32 0.0, %v642
    %644 = vdwg.mxu0
    %vm645 = vcmask 73728
    %v646 = vsel %vm645, %v436, -inf
    %647 = vmax.xlane.f32.xlu0 %v646
    %v648 = vpop.xlane.xlu0 %647
    %v649 = vsel %vm645, %v462, -inf
    %650 = vmax.xlane.f32.xlu0 %v649
    %v651 = vpop.xlane.xlu0 %650
    %v652 = vsel %vm645, %v494, -inf
    %653 = vmax.xlane.f32.xlu0 %v652
    %v654 = vpop.xlane.xlu0 %653
    %v655 = vsel %vm645, %v526, -inf
    %656 = vmax.xlane.f32.xlu0 %v655
    %v657 = vpop.xlane.xlu0 %656
    %v658 = vsel %vm645, %v553, -inf
    %659 = vmax.xlane.f32.xlu0 %v658
    %v660 = vpop.xlane.xlu0 %659
    %v661 = vsel %vm645, %v579, -inf
    %662 = vmax.xlane.f32.xlu0 %v661
    %v663 = vpop.xlane.xlu0 %662
    %v664 = vsel %vm645, %v611, -inf
    %665 = vmax.xlane.f32.xlu0 %v664
    %v666 = vpop.xlane.xlu0 %665
    %v667 = vsel %vm645, %v643, -inf
    %668 = vmax.xlane.f32.xlu0 %v667
    %v669 = vpop.xlane.xlu0 %668
    %v670 = vsub.f32 %v436, %v648
    %v671 = vsub.f32 %v462, %v651
    %v672 = vsub.f32 %v494, %v654
    %v673 = vsub.f32 %v526, %v657
    %v674 = vsub.f32 %v553, %v660
    %v675 = vsub.f32 %v579, %v663
    %v676 = vsub.f32 %v611, %v666
    %v677 = vsub.f32 %v643, %v669
    %v678 = vmul.f32 %v670, 1.442695
    %v679 = vpow.pop %v678
    %v680 = vmul.f32 %v671, 1.442695
    %v681 = vpow.pop %v680
    %v682 = vmul.f32 %v672, 1.442695
    %v683 = vpow.pop %v682
    %v684 = vmul.f32 %v673, 1.442695
    %v685 = vpow.pop %v684
    %v686 = vmul.f32 %v674, 1.442695
    %v687 = vpow.pop %v686
    %v688 = vmul.f32 %v675, 1.442695
    %v689 = vpow.pop %v688
    %v690 = vmul.f32 %v676, 1.442695
    %v691 = vpow.pop %v690
    %v692 = vmul.f32 %v677, 1.442695
    %v693 = vpow.pop %v692
    %v694 = vsel %vm645, %v679, 0.0
    %695 = vadd.xlane.f32.xlu0 %v694
    %v696 = vpop.xlane.xlu0 %695
    %v697 = vsel %vm645, %v681, 0.0
    %698 = vadd.xlane.f32.xlu0 %v697
    %v699 = vpop.xlane.xlu0 %698
    %v700 = vsel %vm645, %v683, 0.0
    %701 = vadd.xlane.f32.xlu0 %v700
    %v702 = vpop.xlane.xlu0 %701
    %v703 = vsel %vm645, %v685, 0.0
    %704 = vadd.xlane.f32.xlu0 %v703
    %v705 = vpop.xlane.xlu0 %704
    %v706 = vsel %vm645, %v687, 0.0
    %707 = vadd.xlane.f32.xlu0 %v706
    %v708 = vpop.xlane.xlu0 %707
    %v709 = vsel %vm645, %v689, 0.0
    %710 = vadd.xlane.f32.xlu0 %v709
    %v711 = vpop.xlane.xlu0 %710
    %v712 = vsel %vm645, %v691, 0.0
    %713 = vadd.xlane.f32.xlu0 %v712
    %v714 = vpop.xlane.xlu0 %713
    %v715 = vsel %vm645, %v693, 0.0
    %716 = vadd.xlane.f32.xlu0 %v715
    %v717 = vpop.xlane.xlu0 %716
    %v718 = vrcp.pop %v696
    %v719 = vmul.f32 %v696, %v718
    %v720 = vsub.f32 1.0, %v719
    %v721 = vmul.f32 %v718, %v720
    %v722 = vadd.f32 %v718, %v721
    %vm723 = vweird.f32 %v696
    %vm724 = vweird.f32 %v718
    %vm725 = vmor %vm723, %vm724
    %v726 = vsel %vm725, %v718, %v722
    %v727 = vand.u32 2147483647, %v696
    %vm728 = vcmp.eq.f32.partialorder %v727, 8.507059e+37
    %v729 = vand.u32 %v696, 2147483648
    %v730 = vor.u32 1.1754944e-38, %v729
    %v731 = vsel %vm728, %v730, %v726
    %v732 = vrcp.pop %v699
    %v733 = vmul.f32 %v699, %v732
    %v734 = vsub.f32 1.0, %v733
    %v735 = vmul.f32 %v732, %v734
    %v736 = vadd.f32 %v732, %v735
    %vm737 = vweird.f32 %v699
    %vm738 = vweird.f32 %v732
    %vm739 = vmor %vm737, %vm738
    %v740 = vsel %vm739, %v732, %v736
    %v741 = vand.u32 2147483647, %v699
    %vm742 = vcmp.eq.f32.partialorder %v741, 8.507059e+37
    %v743 = vand.u32 %v699, 2147483648
    %v744 = vor.u32 1.1754944e-38, %v743
    %v745 = vsel %vm742, %v744, %v740
    %v746 = vrcp.pop %v702
    %v747 = vmul.f32 %v702, %v746
    %v748 = vsub.f32 1.0, %v747
    %v749 = vmul.f32 %v746, %v748
    %v750 = vadd.f32 %v746, %v749
    %vm751 = vweird.f32 %v702
    %vm752 = vweird.f32 %v746
    %vm753 = vmor %vm751, %vm752
    %v754 = vsel %vm753, %v746, %v750
    %v755 = vand.u32 2147483647, %v702
    %vm756 = vcmp.eq.f32.partialorder %v755, 8.507059e+37
    %v757 = vand.u32 %v702, 2147483648
    %v758 = vor.u32 1.1754944e-38, %v757
    %v759 = vsel %vm756, %v758, %v754
    %v760 = vrcp.pop %v705
    %v761 = vmul.f32 %v705, %v760
    %v762 = vsub.f32 1.0, %v761
    %v763 = vmul.f32 %v760, %v762
    %v764 = vadd.f32 %v760, %v763
    %vm765 = vweird.f32 %v705
    %vm766 = vweird.f32 %v760
    %vm767 = vmor %vm765, %vm766
    %v768 = vsel %vm767, %v760, %v764
    %v769 = vand.u32 2147483647, %v705
    %vm770 = vcmp.eq.f32.partialorder %v769, 8.507059e+37
    %v771 = vand.u32 %v705, 2147483648
    %v772 = vor.u32 1.1754944e-38, %v771
    %v773 = vsel %vm770, %v772, %v768
    %v774 = vrcp.pop %v708
    %v775 = vmul.f32 %v708, %v774
    %v776 = vsub.f32 1.0, %v775
    %v777 = vmul.f32 %v774, %v776
    %v778 = vadd.f32 %v774, %v777
    %vm779 = vweird.f32 %v708
    %vm780 = vweird.f32 %v774
    %vm781 = vmor %vm779, %vm780
    %v782 = vsel %vm781, %v774, %v778
    %v783 = vand.u32 2147483647, %v708
    %vm784 = vcmp.eq.f32.partialorder %v783, 8.507059e+37
    %v785 = vand.u32 %v708, 2147483648
    %v786 = vor.u32 1.1754944e-38, %v785
    %v787 = vsel %vm784, %v786, %v782
    %v788 = vrcp.pop %v711
    %v789 = vmul.f32 %v711, %v788
    %v790 = vsub.f32 1.0, %v789
    %v791 = vmul.f32 %v788, %v790
    %v792 = vadd.f32 %v788, %v791
    %vm793 = vweird.f32 %v711
    %vm794 = vweird.f32 %v788
    %vm795 = vmor %vm793, %vm794
    %v796 = vsel %vm795, %v788, %v792
    %v797 = vand.u32 2147483647, %v711
    %vm798 = vcmp.eq.f32.partialorder %v797, 8.507059e+37
    %v799 = vand.u32 %v711, 2147483648
    %v800 = vor.u32 1.1754944e-38, %v799
    %v801 = vsel %vm798, %v800, %v796
    %v802 = vrcp.pop %v714
    %v803 = vmul.f32 %v714, %v802
    %v804 = vsub.f32 1.0, %v803
    %v805 = vmul.f32 %v802, %v804
    %v806 = vadd.f32 %v802, %v805
    %vm807 = vweird.f32 %v714
    %vm808 = vweird.f32 %v802
    %vm809 = vmor %vm807, %vm808
    %v810 = vsel %vm809, %v802, %v806
    %v811 = vand.u32 2147483647, %v714
    %vm812 = vcmp.eq.f32.partialorder %v811, 8.507059e+37
    %v813 = vand.u32 %v714, 2147483648
    %v814 = vor.u32 1.1754944e-38, %v813
    %v815 = vsel %vm812, %v814, %v810
    %v816 = vrcp.pop %v717
    %v817 = vmul.f32 %v717, %v816
    %v818 = vsub.f32 1.0, %v817
    %v819 = vmul.f32 %v816, %v818
    %v820 = vadd.f32 %v816, %v819
    %vm821 = vweird.f32 %v717
    %vm822 = vweird.f32 %v816
    %vm823 = vmor %vm821, %vm822
    %v824 = vsel %vm823, %v816, %v820
    %v825 = vand.u32 2147483647, %v717
    %vm826 = vcmp.eq.f32.partialorder %v825, 8.507059e+37
    %v827 = vand.u32 %v717, 2147483648
    %v828 = vor.u32 1.1754944e-38, %v827
    %v829 = vsel %vm826, %v828, %v824
    %v830 = vmul.f32 %v679, %v731
    %v831 = vmul.f32 %v681, %v745
    %v832 = vmul.f32 %v683, %v759
    %v833 = vmul.f32 %v685, %v773
    %v834 = vmul.f32 %v687, %v787
    %v835 = vmul.f32 %v689, %v801
    %v836 = vmul.f32 %v691, %v815
    %v837 = vmul.f32 %v693, %v829
    %v838 = vadd.f32 %v830, %v832
    %v839 = vadd.f32 %v831, %v833
    %v840 = vadd.f32 %v838, %v834
    %v841 = vadd.f32 %v839, %v835
    %v842 = vadd.f32 %v840, %v836
    %v843 = vadd.f32 %v841, %v837
    %v844 = vmul.f32 %v842, 0.25
    %v845 = vmul.f32 %v843, 0.25
    %846 = vst.msk [vmem:[#allocation7] sm:$0x1] %vm645, %v844
    %847 = vst.msk [vmem:[#allocation7 + $0x1] sm:$0x1] %vm645, %v845
    // Predicated region
    $region34: #{attention_forward.1} parent=1 // pred_check
      _
    $region35: #{attention_forward.1} parent=1 // pred_check_branch
      %849 = sbr.rel (0) target = $region37
    $region36: #{attention_forward.1} parent=1 // pred_region
      %851 = vsyncadd [#allocation4], 0
      %s852 = sshll.u32 [#allocation7], 4
      %s853 = int_to_ptr.vmem [resolvable:$true] %s852
      %s854 = sshll.u32 %s6, 4
      %s855 = int_to_ptr.hbm [resolvable:$true] %s854
      %860 = dma.vmem_to_hbm [thread:$0]  %s853, 32, %s855, [#allocation4], 16, 16, 1
    $region37: #{attention_forward.1} parent=1 // pred_fallthru
      _
    // Predicated region
    $region38: #{attention_forward.1} parent=1 // pred_check
      _
    $region39: #{attention_forward.1} parent=1 // pred_check_branch
      %862 = sbr.rel (0) target = $region41
    $region40: #{attention_forward.1} parent=1 // pred_region
      %864 = dma.done [#allocation4], 32
    $region41: #{attention_forward.1} parent=1 // pred_fallthru
      _
    %865 = vsyncpa [#allocation3], 1
    %866 = vsyncpa [#allocation6], 1
    %867 = vsyncpa [#allocation4], 1

</llo_original>
